<compile_context>
chip_gen: v6e
topology: v6e:2x2x1
jax: 0.10.0
libtpu: 0.0.40
codegen_flags: <defaults>
</compile_context>

<pallas_src>
import functools

import jax
import jax.numpy as jnp
from jax.experimental import pallas as pl
from jax.experimental.pallas import tpu as pltpu

_LANE = 128
_NUM_CORE_SPLITS = 2          # outer "parallel" axis; serial loop on 1-TC chips
_GRAY_W = (0.2989, 0.587, 0.114)


def _round_up(x, m):
    return ((x + m - 1) // m) * m


def _choose_tile(n_rows, n_pix, *, max_tile=2048, vmem_budget=8 * 1024 * 1024):
    """Largest pixel-tile width (multiple of 128, <= max_tile) whose
    double-buffered x + 3-channel-R footprint stays within the VMEM budget."""
    n_pad = _round_up(max(n_rows, 1), 8)          # sublane padding of the batch dim
    per_lane = 2 * 4 * n_pad * 4                  # 2 buffers x 4 f32 channels x rows
    tp = (vmem_budget // per_lane) // _LANE * _LANE
    tp = min(max_tile, tp, _round_up(n_pix, _LANE))
    return max(_LANE, tp)


def _lsc_stats_kernel(x_ref, r_ref, acc_ref, *, n_lane_groups):
    """Accumulate sufficient statistics for global SSIM over a pixel stream.

    x_ref  : (N, TP)        current pixel tile of Iscb (native dtype)
    r_ref  : (3, N, TP)     current pixel tile of R, channel-major
    acc_ref: (1, 5, N, 128) output block, revisited across the pixel axis:
             [sum x, sum x^2, sum y, sum y^2, sum x*y], folded to 128 lanes.
    """
    p = pl.program_id(1)

    x = x_ref[...].astype(jnp.float32)
    y = (_GRAY_W[0] * r_ref[0].astype(jnp.float32)
         + _GRAY_W[1] * r_ref[1].astype(jnp.float32)
         + _GRAY_W[2] * r_ref[2].astype(jnp.float32))

    def fold(a):
        # (N, TP) -> (N, 128): lane-aligned static slices + VALU adds (no XLU).
        s = a[:, 0:_LANE]
        for k in range(1, n_lane_groups):
            s = s + a[:, k * _LANE:(k + 1) * _LANE]
        return s

    px, pxx = fold(x), fold(x * x)
    py, pyy = fold(y), fold(y * y)
    pxy = fold(x * y)

    @pl.when(p == 0)
    def _init():
        acc_ref[0, 0] = px
        acc_ref[0, 1] = pxx
        acc_ref[0, 2] = py
        acc_ref[0, 3] = pyy
        acc_ref[0, 4] = pxy

    @pl.when(p != 0)
    def _accumulate():
        acc_ref[0, 0] += px
        acc_ref[0, 1] += pxx
        acc_ref[0, 2] += py
        acc_ref[0, 3] += pyy
        acc_ref[0, 4] += pxy


def lsc_forward(Iscb, R, *, max_tile_pixels=2048):
    """Iscb: (N,1,H,W), R: (N,3,H,W) NCHW arrays -> scalar loss (f32)."""
    N, C1, H, W = Iscb.shape
    assert C1 == 1 and R.shape == (N, 3, H, W)
    P = H * W
    n_elems = N * P
    assert n_elems > 1, "need >= 2 pixels for the unbiased variance (n-1)"

    TP = _choose_tile(N, P, max_tile=max_tile_pixels)
    NC = _NUM_CORE_SPLITS
    blocks = _round_up(pl.cdiv(P, TP), NC)
    inner = blocks // NC
    P_pad = blocks * TP

    # Layout plumbing only; no dtype cast here (cast happens in-kernel).
    x2 = Iscb.reshape(N, P)
    r2 = jnp.transpose(R.reshape(N, 3, P), (1, 0, 2))          # (3, N, P)
    if P_pad != P:
        # zero padding contributes 0 to every sufficient statistic
        x2 = jnp.pad(x2, ((0, 0), (0, P_pad - P)))
        r2 = jnp.pad(r2, ((0, 0), (0, 0), (0, P_pad - P)))

    kernel = functools.partial(_lsc_stats_kernel, n_lane_groups=TP // _LANE)
    bytes_in = x2.size * x2.dtype.itemsize + r2.size * r2.dtype.itemsize

    partials = pl.pallas_call(
        kernel,
        out_shape=jax.ShapeDtypeStruct((NC, 5, N, _LANE), jnp.float32),
        grid=(NC, inner),
        in_specs=[
            pl.BlockSpec((N, TP), lambda c, p: (0, c * inner + p)),
            pl.BlockSpec((3, N, TP), lambda c, p: (0, 0, c * inner + p)),
        ],
        out_specs=pl.BlockSpec((1, 5, N, _LANE), lambda c, p: (c, 0, 0, 0)),
        compiler_params=pltpu.CompilerParams(
            dimension_semantics=("parallel", "arbitrary"),
            vmem_limit_bytes=32 * 1024 * 1024,
        ),
        cost_estimate=pl.CostEstimate(
            flops=16 * N * P_pad,
            transcendentals=0,
            bytes_accessed=bytes_in + NC * 5 * N * _LANE * 4,
        ),
    )(x2, r2)

    # Tiny epilogue on the (NC, 5, N, 128) partials: cross-lane reduce once,
    # then the scalar SSIM formula in f32 (reviewer-approved wrapper finalize).
    sums = jnp.sum(partials, axis=(0, 2, 3))                    # (5,)
    sum_x, sum_xx, sum_y, sum_yy, sum_xy = (sums[i] for i in range(5))

    n = jnp.float32(n_elems)
    ss_x = jnp.maximum(sum_xx - sum_x * sum_x / n, 0.0)
    ss_y = jnp.maximum(sum_yy - sum_y * sum_y / n, 0.0)
    ss_xy = sum_xy - sum_x * sum_y / n

    ox_sq = ss_x / (n - 1.0)       # torch.var -> unbiased
    oy_sq = ss_y / (n - 1.0)
    oxy = ss_xy / n                # torch.mean -> biased covariance
    ox = jnp.sqrt(ox_sq)
    oy = jnp.sqrt(oy_sq)

    K2, L = 0.03, 1.0
    C2 = (K2 * L) ** 2
    C3 = C2 / 2.0
    C = (2.0 * ox * oy + C2) / (ox_sq + oy_sq + C2)
    S = (oxy + C3) / (ox * oy + C3)
    return 1.0 - S * C


def _lsc_reference(Iscb, R):
    # Pure-JAX reference mirroring the PyTorch code (two-pass, centered).
    gray = (_GRAY_W[0] * R[:, 0:1] + _GRAY_W[1] * R[:, 1:2]
            + _GRAY_W[2] * R[:, 2:3])
    x = Iscb.astype(jnp.float32)
    y = gray.astype(jnp.float32)
    n = x.size
    ux, uy = jnp.mean(x), jnp.mean(y)
    ox_sq = jnp.sum((x - ux) ** 2) / (n - 1)
    oy_sq = jnp.sum((y - uy) ** 2) / (n - 1)
    ox, oy = jnp.sqrt(ox_sq), jnp.sqrt(oy_sq)
    oxy = jnp.mean((x - ux) * (y - uy))
    C2 = 0.03 ** 2
    C3 = C2 / 2
    C = (2 * ox * oy + C2) / (ox_sq + oy_sq + C2)
    S = (oxy + C3) / (ox * oy + C3)
    return 1.0 - S * C


if __name__ == "__main__":
    key = jax.random.PRNGKey(0)
    k1, k2 = jax.random.split(key)
    N, H, W = 2, 16, 16
    Iscb = jax.random.uniform(k1, (N, 1, H, W), dtype=jnp.float32)
    R = jax.random.uniform(k2, (N, 3, H, W), dtype=jnp.float32)

    loss = jax.block_until_ready(lsc_forward(Iscb, R))
    ref = jax.block_until_ready(_lsc_reference(Iscb, R))

    assert jnp.allclose(loss, ref, rtol=1e-4, atol=1e-5), (loss, ref)
    print("KERNEL_OK")
</pallas_src>

<mosaic_0001>
module attributes {stable_mosaic.version = 11 : i64} {
  func.func @_lsc_stats_kernel(%arg0: i32, %arg1: i32, %arg2: memref<2x256xf32, #tpu.memory_space<vmem>>, %arg3: memref<3x2x256xf32, #tpu.memory_space<vmem>>, %arg4: memref<1x5x2x128xf32, #tpu.memory_space<vmem>>) attributes {dimension_semantics = [#tpu.dimension_semantics<parallel>, #tpu.dimension_semantics<arbitrary>], iteration_bounds = array<i64: 2, 1>, scalar_prefetch = 0 : i64, scratch_operands = 0 : i64, tpu.core_type = #tpu.core_type<tc>, window_params = [{transform_indices = @transform_0, window_bounds = array<i64: 2, 256>}, {transform_indices = @transform_1, window_bounds = array<i64: 3, 2, 256>}, {transform_indices = @transform_2, window_bounds = array<i64: 1, 5, 2, 128>}]} {
    %c0 = arith.constant 0 : index
    %c0_0 = arith.constant 0 : index
    %0 = vector.load %arg2[%c0, %c0_0] : memref<2x256xf32, #tpu.memory_space<vmem>>, vector<2x256xf32>
    %c0_1 = arith.constant 0 : index
    %c0_2 = arith.constant 0 : index
    %c0_3 = arith.constant 0 : index
    %1 = vector.load %arg3[%c0_1, %c0_2, %c0_3] : memref<3x2x256xf32, #tpu.memory_space<vmem>>, vector<1x2x256xf32>
    %2 = vector.shape_cast %1 : vector<1x2x256xf32> to vector<2x256xf32>
    %cst = arith.constant 2.989000e-01 : f32
    %3 = vector.broadcast %cst : f32 to vector<2x256xf32>
    %4 = arith.mulf %3, %2 : vector<2x256xf32>
    %c1 = arith.constant 1 : index
    %c0_4 = arith.constant 0 : index
    %c0_5 = arith.constant 0 : index
    %5 = vector.load %arg3[%c1, %c0_4, %c0_5] : memref<3x2x256xf32, #tpu.memory_space<vmem>>, vector<1x2x256xf32>
    %6 = vector.shape_cast %5 : vector<1x2x256xf32> to vector<2x256xf32>
    %cst_6 = arith.constant 5.870000e-01 : f32
    %7 = vector.broadcast %cst_6 : f32 to vector<2x256xf32>
    %8 = arith.mulf %7, %6 : vector<2x256xf32>
    %9 = arith.addf %4, %8 : vector<2x256xf32>
    %c2 = arith.constant 2 : index
    %c0_7 = arith.constant 0 : index
    %c0_8 = arith.constant 0 : index
    %10 = vector.load %arg3[%c2, %c0_7, %c0_8] : memref<3x2x256xf32, #tpu.memory_space<vmem>>, vector<1x2x256xf32>
    %11 = vector.shape_cast %10 : vector<1x2x256xf32> to vector<2x256xf32>
    %cst_9 = arith.constant 1.140000e-01 : f32
    %12 = vector.broadcast %cst_9 : f32 to vector<2x256xf32>
    %13 = arith.mulf %12, %11 : vector<2x256xf32>
    %14 = arith.addf %9, %13 : vector<2x256xf32>
    %15 = vector.extract_strided_slice %0 {offsets = [0, 0], sizes = [2, 128], strides = [1, 1]} : vector<2x256xf32> to vector<2x128xf32>
    %16 = vector.extract_strided_slice %0 {offsets = [0, 128], sizes = [2, 128], strides = [1, 1]} : vector<2x256xf32> to vector<2x128xf32>
    %17 = arith.addf %15, %16 : vector<2x128xf32>
    %18 = arith.mulf %0, %0 : vector<2x256xf32>
    %19 = vector.extract_strided_slice %18 {offsets = [0, 0], sizes = [2, 128], strides = [1, 1]} : vector<2x256xf32> to vector<2x128xf32>
    %20 = vector.extract_strided_slice %18 {offsets = [0, 128], sizes = [2, 128], strides = [1, 1]} : vector<2x256xf32> to vector<2x128xf32>
    %21 = arith.addf %19, %20 : vector<2x128xf32>
    %22 = vector.extract_strided_slice %14 {offsets = [0, 0], sizes = [2, 128], strides = [1, 1]} : vector<2x256xf32> to vector<2x128xf32>
    %23 = vector.extract_strided_slice %14 {offsets = [0, 128], sizes = [2, 128], strides = [1, 1]} : vector<2x256xf32> to vector<2x128xf32>
    %24 = arith.addf %22, %23 : vector<2x128xf32>
    %25 = arith.mulf %14, %14 : vector<2x256xf32>
    %26 = vector.extract_strided_slice %25 {offsets = [0, 0], sizes = [2, 128], strides = [1, 1]} : vector<2x256xf32> to vector<2x128xf32>
    %27 = vector.extract_strided_slice %25 {offsets = [0, 128], sizes = [2, 128], strides = [1, 1]} : vector<2x256xf32> to vector<2x128xf32>
    %28 = arith.addf %26, %27 : vector<2x128xf32>
    %29 = arith.mulf %0, %14 : vector<2x256xf32>
    %30 = vector.extract_strided_slice %29 {offsets = [0, 0], sizes = [2, 128], strides = [1, 1]} : vector<2x256xf32> to vector<2x128xf32>
    %31 = vector.extract_strided_slice %29 {offsets = [0, 128], sizes = [2, 128], strides = [1, 1]} : vector<2x256xf32> to vector<2x128xf32>
    %32 = arith.addf %30, %31 : vector<2x128xf32>
    %c0_i32 = arith.constant 0 : i32
    %33 = arith.cmpi eq, %arg1, %c0_i32 : i32
    %34 = arith.extui %33 : i1 to i32
    %c0_i32_10 = arith.constant 0 : i32
    %35 = arith.cmpi ne, %34, %c0_i32_10 : i32
    scf.if %35 {
      %c0_13 = arith.constant 0 : index
      %c0_14 = arith.constant 0 : index
      %c0_15 = arith.constant 0 : index
      %c0_16 = arith.constant 0 : index
      %39 = vector.load %arg4[%c0_13, %c0_14, %c0_15, %c0_16] : memref<1x5x2x128xf32, #tpu.memory_space<vmem>>, vector<1x1x2x128xf32>
      %40 = vector.shape_cast %39 : vector<1x1x2x128xf32> to vector<2x128xf32>
      %41 = vector.shape_cast %17 : vector<2x128xf32> to vector<1x1x2x128xf32>
      tpu.vector_store %arg4[%c0_13, %c0_14, %c0_15, %c0_16], %41 {strides = array<i32>} : memref<1x5x2x128xf32, #tpu.memory_space<vmem>>, vector<1x1x2x128xf32>,
      %c0_17 = arith.constant 0 : index
      %c1_18 = arith.constant 1 : index
      %c0_19 = arith.constant 0 : index
      %c0_20 = arith.constant 0 : index
      %42 = vector.load %arg4[%c0_17, %c1_18, %c0_19, %c0_20] : memref<1x5x2x128xf32, #tpu.memory_space<vmem>>, vector<1x1x2x128xf32>
      %43 = vector.shape_cast %42 : vector<1x1x2x128xf32> to vector<2x128xf32>
      %44 = vector.shape_cast %21 : vector<2x128xf32> to vector<1x1x2x128xf32>
      tpu.vector_store %arg4[%c0_17, %c1_18, %c0_19, %c0_20], %44 {strides = array<i32>} : memref<1x5x2x128xf32, #tpu.memory_space<vmem>>, vector<1x1x2x128xf32>,
      %c0_21 = arith.constant 0 : index
      %c2_22 = arith.constant 2 : index
      %c0_23 = arith.constant 0 : index
      %c0_24 = arith.constant 0 : index
      %45 = vector.load %arg4[%c0_21, %c2_22, %c0_23, %c0_24] : memref<1x5x2x128xf32, #tpu.memory_space<vmem>>, vector<1x1x2x128xf32>
      %46 = vector.shape_cast %45 : vector<1x1x2x128xf32> to vector<2x128xf32>
      %47 = vector.shape_cast %24 : vector<2x128xf32> to vector<1x1x2x128xf32>
      tpu.vector_store %arg4[%c0_21, %c2_22, %c0_23, %c0_24], %47 {strides = array<i32>} : memref<1x5x2x128xf32, #tpu.memory_space<vmem>>, vector<1x1x2x128xf32>,
      %c0_25 = arith.constant 0 : index
      %c3 = arith.constant 3 : index
      %c0_26 = arith.constant 0 : index
      %c0_27 = arith.constant 0 : index
      %48 = vector.load %arg4[%c0_25, %c3, %c0_26, %c0_27] : memref<1x5x2x128xf32, #tpu.memory_space<vmem>>, vector<1x1x2x128xf32>
      %49 = vector.shape_cast %48 : vector<1x1x2x128xf32> to vector<2x128xf32>
      %50 = vector.shape_cast %28 : vector<2x128xf32> to vector<1x1x2x128xf32>
      tpu.vector_store %arg4[%c0_25, %c3, %c0_26, %c0_27], %50 {strides = array<i32>} : memref<1x5x2x128xf32, #tpu.memory_space<vmem>>, vector<1x1x2x128xf32>,
      %c0_28 = arith.constant 0 : index
      %c4 = arith.constant 4 : index
      %c0_29 = arith.constant 0 : index
      %c0_30 = arith.constant 0 : index
      %51 = vector.load %arg4[%c0_28, %c4, %c0_29, %c0_30] : memref<1x5x2x128xf32, #tpu.memory_space<vmem>>, vector<1x1x2x128xf32>
      %52 = vector.shape_cast %51 : vector<1x1x2x128xf32> to vector<2x128xf32>
      %53 = vector.shape_cast %32 : vector<2x128xf32> to vector<1x1x2x128xf32>
      tpu.vector_store %arg4[%c0_28, %c4, %c0_29, %c0_30], %53 {strides = array<i32>} : memref<1x5x2x128xf32, #tpu.memory_space<vmem>>, vector<1x1x2x128xf32>,
    } else {
    }
    %c0_i32_11 = arith.constant 0 : i32
    %36 = arith.cmpi ne, %arg1, %c0_i32_11 : i32
    %37 = arith.extui %36 : i1 to i32
    %c0_i32_12 = arith.constant 0 : i32
    %38 = arith.cmpi ne, %37, %c0_i32_12 : i32
    scf.if %38 {
      %c0_13 = arith.constant 0 : index
      %c0_14 = arith.constant 0 : index
      %c0_15 = arith.constant 0 : index
      %c0_16 = arith.constant 0 : index
      %39 = vector.load %arg4[%c0_13, %c0_14, %c0_15, %c0_16] : memref<1x5x2x128xf32, #tpu.memory_space<vmem>>, vector<1x1x2x128xf32>
      %40 = vector.shape_cast %39 : vector<1x1x2x128xf32> to vector<2x128xf32>
      %41 = arith.addf %40, %17 : vector<2x128xf32>
      %c0_17 = arith.constant 0 : index
      %c0_18 = arith.constant 0 : index
      %c0_19 = arith.constant 0 : index
      %c0_20 = arith.constant 0 : index
      %42 = vector.load %arg4[%c0_17, %c0_18, %c0_19, %c0_20] : memref<1x5x2x128xf32, #tpu.memory_space<vmem>>, vector<1x1x2x128xf32>
      %43 = vector.shape_cast %42 : vector<1x1x2x128xf32> to vector<2x128xf32>
      %44 = vector.shape_cast %41 : vector<2x128xf32> to vector<1x1x2x128xf32>
      tpu.vector_store %arg4[%c0_17, %c0_18, %c0_19, %c0_20], %44 {strides = array<i32>} : memref<1x5x2x128xf32, #tpu.memory_space<vmem>>, vector<1x1x2x128xf32>,
      %c0_21 = arith.constant 0 : index
      %c1_22 = arith.constant 1 : index
      %c0_23 = arith.constant 0 : index
      %c0_24 = arith.constant 0 : index
      %45 = vector.load %arg4[%c0_21, %c1_22, %c0_23, %c0_24] : memref<1x5x2x128xf32, #tpu.memory_space<vmem>>, vector<1x1x2x128xf32>
      %46 = vector.shape_cast %45 : vector<1x1x2x128xf32> to vector<2x128xf32>
      %47 = arith.addf %46, %21 : vector<2x128xf32>
      %c0_25 = arith.constant 0 : index
      %c1_26 = arith.constant 1 : index
      %c0_27 = arith.constant 0 : index
      %c0_28 = arith.constant 0 : index
      %48 = vector.load %arg4[%c0_25, %c1_26, %c0_27, %c0_28] : memref<1x5x2x128xf32, #tpu.memory_space<vmem>>, vector<1x1x2x128xf32>
      %49 = vector.shape_cast %48 : vector<1x1x2x128xf32> to vector<2x128xf32>
      %50 = vector.shape_cast %47 : vector<2x128xf32> to vector<1x1x2x128xf32>
      tpu.vector_store %arg4[%c0_25, %c1_26, %c0_27, %c0_28], %50 {strides = array<i32>} : memref<1x5x2x128xf32, #tpu.memory_space<vmem>>, vector<1x1x2x128xf32>,
      %c0_29 = arith.constant 0 : index
      %c2_30 = arith.constant 2 : index
      %c0_31 = arith.constant 0 : index
      %c0_32 = arith.constant 0 : index
      %51 = vector.load %arg4[%c0_29, %c2_30, %c0_31, %c0_32] : memref<1x5x2x128xf32, #tpu.memory_space<vmem>>, vector<1x1x2x128xf32>
      %52 = vector.shape_cast %51 : vector<1x1x2x128xf32> to vector<2x128xf32>
      %53 = arith.addf %52, %24 : vector<2x128xf32>
      %c0_33 = arith.constant 0 : index
      %c2_34 = arith.constant 2 : index
      %c0_35 = arith.constant 0 : index
      %c0_36 = arith.constant 0 : index
      %54 = vector.load %arg4[%c0_33, %c2_34, %c0_35, %c0_36] : memref<1x5x2x128xf32, #tpu.memory_space<vmem>>, vector<1x1x2x128xf32>
      %55 = vector.shape_cast %54 : vector<1x1x2x128xf32> to vector<2x128xf32>
      %56 = vector.shape_cast %53 : vector<2x128xf32> to vector<1x1x2x128xf32>
      tpu.vector_store %arg4[%c0_33, %c2_34, %c0_35, %c0_36], %56 {strides = array<i32>} : memref<1x5x2x128xf32, #tpu.memory_space<vmem>>, vector<1x1x2x128xf32>,
      %c0_37 = arith.constant 0 : index
      %c3 = arith.constant 3 : index
      %c0_38 = arith.constant 0 : index
      %c0_39 = arith.constant 0 : index
      %57 = vector.load %arg4[%c0_37, %c3, %c0_38, %c0_39] : memref<1x5x2x128xf32, #tpu.memory_space<vmem>>, vector<1x1x2x128xf32>
      %58 = vector.shape_cast %57 : vector<1x1x2x128xf32> to vector<2x128xf32>
      %59 = arith.addf %58, %28 : vector<2x128xf32>
      %c0_40 = arith.constant 0 : index
      %c3_41 = arith.constant 3 : index
      %c0_42 = arith.constant 0 : index
      %c0_43 = arith.constant 0 : index
      %60 = vector.load %arg4[%c0_40, %c3_41, %c0_42, %c0_43] : memref<1x5x2x128xf32, #tpu.memory_space<vmem>>, vector<1x1x2x128xf32>
      %61 = vector.shape_cast %60 : vector<1x1x2x128xf32> to vector<2x128xf32>
      %62 = vector.shape_cast %59 : vector<2x128xf32> to vector<1x1x2x128xf32>
      tpu.vector_store %arg4[%c0_40, %c3_41, %c0_42, %c0_43], %62 {strides = array<i32>} : memref<1x5x2x128xf32, #tpu.memory_space<vmem>>, vector<1x1x2x128xf32>,
      %c0_44 = arith.constant 0 : index
      %c4 = arith.constant 4 : index
      %c0_45 = arith.constant 0 : index
      %c0_46 = arith.constant 0 : index
      %63 = vector.load %arg4[%c0_44, %c4, %c0_45, %c0_46] : memref<1x5x2x128xf32, #tpu.memory_space<vmem>>, vector<1x1x2x128xf32>
      %64 = vector.shape_cast %63 : vector<1x1x2x128xf32> to vector<2x128xf32>
      %65 = arith.addf %64, %32 : vector<2x128xf32>
      %c0_47 = arith.constant 0 : index
      %c4_48 = arith.constant 4 : index
      %c0_49 = arith.constant 0 : index
      %c0_50 = arith.constant 0 : index
      %66 = vector.load %arg4[%c0_47, %c4_48, %c0_49, %c0_50] : memref<1x5x2x128xf32, #tpu.memory_space<vmem>>, vector<1x1x2x128xf32>
      %67 = vector.shape_cast %66 : vector<1x1x2x128xf32> to vector<2x128xf32>
      %68 = vector.shape_cast %65 : vector<2x128xf32> to vector<1x1x2x128xf32>
      tpu.vector_store %arg4[%c0_47, %c4_48, %c0_49, %c0_50], %68 {strides = array<i32>} : memref<1x5x2x128xf32, #tpu.memory_space<vmem>>, vector<1x1x2x128xf32>,
    } else {
    }
    return
  }
  func.func @transform_0(%arg0: i32, %arg1: i32) -> (i32, i32) {
    %c1_i32 = arith.constant 1 : i32
    %0 = arith.muli %arg0, %c1_i32 : i32
    %1 = arith.addi %0, %arg1 : i32
    %c0_i32 = arith.constant 0 : i32
    %c0_i32_0 = arith.constant 0 : i32
    return %c0_i32, %1 : i32, i32
  }
  func.func @transform_1(%arg0: i32, %arg1: i32) -> (i32, i32, i32) {
    %c1_i32 = arith.constant 1 : i32
    %0 = arith.muli %arg0, %c1_i32 : i32
    %1 = arith.addi %0, %arg1 : i32
    %c0_i32 = arith.constant 0 : i32
    %c0_i32_0 = arith.constant 0 : i32
    %c0_i32_1 = arith.constant 0 : i32
    return %c0_i32, %c0_i32_0, %1 : i32, i32, i32
  }
  func.func @transform_2(%arg0: i32, %arg1: i32) -> (i32, i32, i32, i32) {
    %c0_i32 = arith.constant 0 : i32
    %c0_i32_0 = arith.constant 0 : i32
    %c0_i32_1 = arith.constant 0 : i32
    %c0_i32_2 = arith.constant 0 : i32
    return %arg0, %c0_i32, %c0_i32_0, %c0_i32_1 : i32, i32, i32, i32
  }
}

</mosaic_0001>

<llo_original>
// kernel: tpu_custom_call.1
$region0: #{tpu_custom_call.1}
  #allocation0 [shape = 'u32[]', space=smem, size = 0x4, offset = 0x4, fixed_abs, tag = 'smem constant byte address 0x4 - core index']
  #allocation1 [shape = 'u32[144,128]{1,0:T(1,128)}', space=vmem, size = 0x12000, scoped, tag = 'internal scratch']
  %s0 = inlined_call_operand.hbm [shape: f32[2,512], index: 0, kind: input, shape index: {}]
  %s1 = inlined_call_operand.hbm [shape: f32[3,2,512], index: 1, kind: input, shape index: {}]
  %s2 = inlined_call_operand.hbm [shape: f32[2,5,2,128], index: 2, kind: output, shape index: {}]
  %s3 = sld [smem:[#allocation0]]
  $region57: #{tpu_custom_call.1} parent=0
    _
  %s5 = ssub.s32 1, %s3
  %s6 = scalar_select 0, %s5, %s3
  $region1: #{tpu_custom_call.1} parent=0
    #allocation2 [shape = 'u8[4096]{0}', space=vmem, size = 0x1000, scoped, tag = 'input window, operand 0']
    #allocation3 [shape = 's32[2]{0}', space=sflag, size = 0x8, scoped, tag = 'scoped memory for tpu_custom_call.1']
    #allocation4 [shape = 's32[2]{0}', space=sflag, size = 0x8, scoped, tag = 'scoped memory for tpu_custom_call.1']
    #allocation5 [shape = 'u8[12288]{0}', space=vmem, size = 0x3000, scoped, tag = 'input window, operand 1']
    #allocation6 [shape = 's32[2]{0}', space=sflag, size = 0x8, scoped, tag = 'scoped memory for tpu_custom_call.1']
    #allocation7 [shape = 'u8[10240]{0}', space=vmem, size = 0x2800, scoped, tag = 'output window, operand 0']
    %7 = vsyncpa [#allocation3], 0
    %s8 = scalar_lea.sflag [#allocation3], 1
    %9 = vsyncpa %s8, 0
    %10 = vsyncpa [#allocation6], 0
    %s11 = scalar_lea.sflag [#allocation6], 1
    %12 = vsyncpa %s11, 0
    %13 = vsyncpa [#allocation4], 0
    %s14 = scalar_lea.sflag [#allocation4], 1
    %15 = vsyncpa %s14, 0
    loop: start=0, step=1, limit=4
    $region2: #{tpu_custom_call.1} parent=1 // loop_pre_header
      _
    $region3: #{tpu_custom_call.1} parent=1 // loop_header
      %s17 = sphi 0, %s21
      %p18 = scmp.ge.s32.totalorder %s17, 4
      %s24 = sphi 0, %s36
      %s25 = sphi 0, %s32
      %s26 = sphi 0, %s24
      %s27 = sphi 0, %s25
      %s28 = sphi 0, %s26
      %s29 = sphi 0, %s27
      %s41 = sphi 0, %s43
      %s44 = sphi 0, %s41
      %s45 = sphi 0, %s44
      %s61 = sphi 0, %s45
      %s69 = sphi 0, %s71
      %s72 = sphi 0, %s69
      %s73 = sphi 0, %s72
      %s89 = sphi 0, %s73
      %s95 = sphi 0, %s97
      %s98 = sphi 0, %s95
      %s99 = sphi 0, %s98
      %s115 = sphi 0, %s99
    $region4: #{tpu_custom_call.1} parent=1 // loop_header_branch
      %20 = sbr.rel (%p18) target = $region8
    $region5: #{tpu_custom_call.1} parent=1 // loop_body
      %s22 = ssub.s32 %s17, 1
      %s23 = ssub.s32 %s17, 2
      %s30 = sadd.s32 1, %s25
      %p31 = scmp.ge.s32.totalorder %s30, 1
      %s32 = scalar_select %p31, 0, %s30
      %s33 = sadd.s32 1, %s24
      %s34 = scalar_select %p31, %s33, %s24
      %p35 = scmp.ge.s32.totalorder %s34, 2
      %s36 = scalar_select %p35, 0, %s34
      %s37 = sadd.s32 %s24, %s25
      %s38 = sadd.s32 %s36, %s32
      %s39 = ssub.s32 %s37, %s38
      %p40 = scmp.eq.s32.totalorder %s39, 0
      %s42 = sadd.s32 %s41, 1
      %s43 = scalar_select %p40, %s41, %s42
      %p46 = pneg %p40
      %p47 = scmp.eq.s32.totalorder %s17, 1
      %p48 = por %p46, %p47
      %p49 = scmp.ne.s32.totalorder %s41, %s44
      %p50 = scmp.eq.s32.totalorder %s17, 0
      %p51 = por %p49, %p50
      %p52 = scmp.ne.s32.totalorder %s41, %s44
      %p53 = scmp.eq.s32.totalorder %s22, 1
      %p54 = por %p52, %p53
      %p55 = scmp.ne.s32.totalorder %s44, %s45
      %p56 = scmp.eq.s32.totalorder %s22, 0
      %p57 = por %p55, %p56
      %p58 = scmp.ne.s32.totalorder %s44, %s45
      %p59 = scmp.eq.s32.totalorder %s23, 1
      %p60 = por %p58, %p59
      %p62 = scmp.ne.s32.totalorder %s45, %s61
      %p63 = scmp.eq.s32.totalorder %s23, 0
      %p64 = por %p62, %p63
      %s65 = sadd.s32 %s24, %s25
      %s66 = sadd.s32 %s36, %s32
      %s67 = ssub.s32 %s65, %s66
      %p68 = scmp.eq.s32.totalorder %s67, 0
      %s70 = sadd.s32 %s69, 1
      %s71 = scalar_select %p68, %s69, %s70
      %p74 = pneg %p68
      %p75 = scmp.eq.s32.totalorder %s17, 1
      %p76 = por %p74, %p75
      %p77 = scmp.ne.s32.totalorder %s69, %s72
      %p78 = scmp.eq.s32.totalorder %s17, 0
      %p79 = por %p77, %p78
      %p80 = scmp.ne.s32.totalorder %s69, %s72
      %p81 = scmp.eq.s32.totalorder %s22, 1
      %p82 = por %p80, %p81
      %p83 = scmp.ne.s32.totalorder %s72, %s73
      %p84 = scmp.eq.s32.totalorder %s22, 0
      %p85 = por %p83, %p84
      %p86 = scmp.ne.s32.totalorder %s72, %s73
      %p87 = scmp.eq.s32.totalorder %s23, 1
      %p88 = por %p86, %p87
      %p90 = scmp.ne.s32.totalorder %s73, %s89
      %p91 = scmp.eq.s32.totalorder %s23, 0
      %p92 = por %p90, %p91
      %s93 = ssub.s32 %s24, %s36
      %p94 = scmp.eq.s32.totalorder %s93, 0
      %s96 = sadd.s32 %s95, 1
      %s97 = scalar_select %p94, %s95, %s96
      %p100 = pneg %p94
      %p101 = scmp.eq.s32.totalorder %s17, 1
      %p102 = por %p100, %p101
      %p103 = scmp.ne.s32.totalorder %s95, %s98
      %p104 = scmp.eq.s32.totalorder %s17, 0
      %p105 = por %p103, %p104
      %p106 = scmp.ne.s32.totalorder %s95, %s98
      %p107 = scmp.eq.s32.totalorder %s22, 1
      %p108 = por %p106, %p107
      %p109 = scmp.ne.s32.totalorder %s98, %s99
      %p110 = scmp.eq.s32.totalorder %s22, 0
      %p111 = por %p109, %p110
      %p112 = scmp.ne.s32.totalorder %s98, %s99
      %p113 = scmp.eq.s32.totalorder %s23, 1
      %p114 = por %p112, %p113
      %p116 = scmp.ne.s32.totalorder %s99, %s115
      %p117 = scmp.eq.s32.totalorder %s23, 0
      %p118 = por %p116, %p117
      %p119 = scmp.le.s32.totalorder 1, %s17
      %p120 = scmp.lt.s32.totalorder %s17, 3
      %p121 = pnand %p119, %p120
      %p122 = pneg %p121
      // Predicated region
      $region9: #{tpu_custom_call.1} parent=5 // pred_check
        _
      $region10: #{tpu_custom_call.1} parent=5 // pred_check_branch
        %124 = sbr.rel (%p121) target = $region12
      $region11: #{tpu_custom_call.1} parent=5 // pred_region
        %s125 = ssub.s32 %s17, 1
      $region12: #{tpu_custom_call.1} parent=5 // pred_fallthru
        _
      %p126 = scmp.lt.s32.totalorder %s17, 2
      // Predicated region
      $region13: #{tpu_custom_call.1} parent=5 // pred_check
        %p127 = pneg %p126
      $region14: #{tpu_custom_call.1} parent=5 // pred_check_branch
        %129 = sbr.rel (%p127) target = $region16
      $region15: #{tpu_custom_call.1} parent=5 // pred_region
        // Predicated region
        $region17: #{tpu_custom_call.1} parent=15 // pred_check
          %p130 = pneg %p51
        $region18: #{tpu_custom_call.1} parent=15 // pred_check_branch
          %132 = sbr.rel (%p130) target = $region20
        $region19: #{tpu_custom_call.1} parent=15 // pred_region
          %s133 = sand.u32 %s41, 1
          %s134 = scalar_lea.sflag [#allocation3], %s133
          %s135 = sand.u32 %s41, 1
          %s136 = smul.addr %s135, 4
          %s137 = scalar_lea.vmem [#allocation2], %s136
          %s138 = sadd.s32 %s24, %s25
          %s139 = smul.u32 2, %s138
          %s141 = ssub.s32 64, 64
          %142 = vsyncadd %s134, %s141
          %s143 = smul.addr %s139, 32
          %s144 = scalar_lea.hbm %s0, %s143
          %s146 = sshll.u32 %s137, 4
          %s147 = int_to_ptr.vmem [resolvable:$true] %s146
          %149 = dma.hbm_to_vmem [thread:$0]  %s144, 64, %s147, %s134
        $region20: #{tpu_custom_call.1} parent=15 // pred_fallthru
          _
        // Predicated region
        $region21: #{tpu_custom_call.1} parent=15 // pred_check
          %p150 = pneg %p79
        $region22: #{tpu_custom_call.1} parent=15 // pred_check_branch
          %152 = sbr.rel (%p150) target = $region24
        $region23: #{tpu_custom_call.1} parent=15 // pred_region
          %s153 = sand.u32 %s69, 1
          %s154 = scalar_lea.sflag [#allocation6], %s153
          %s155 = sand.u32 %s69, 1
          %s156 = smul.addr %s155, 12
          %s157 = scalar_lea.vmem [#allocation5], %s156
          %s158 = sadd.s32 %s24, %s25
          %s159 = smul.u32 2, %s158
          %s161 = ssub.s32 192, 192
          %162 = vsyncadd %s154, %s161
          %s163 = smul.addr %s159, 32
          %s164 = scalar_lea.hbm %s1, %s163
          %s165 = sshll.u32 %s157, 4
          %s166 = int_to_ptr.vmem [resolvable:$true] %s165
          %171 = dma.hbm_to_vmem [thread:$0]  %s164, 192, %s166, %s154, 128, 64, 4
        $region24: #{tpu_custom_call.1} parent=15 // pred_fallthru
          _
      $region16: #{tpu_custom_call.1} parent=5 // pred_fallthru
        _
      %p172 = scmp.le.s32.totalorder 1, %s17
      %p173 = scmp.lt.s32.totalorder %s17, 3
      %p174 = pnand %p172, %p173
      %p175 = pneg %p174
      // Predicated region
      $region25: #{tpu_custom_call.1} parent=5 // pred_check
        _
      $region26: #{tpu_custom_call.1} parent=5 // pred_check_branch
        %177 = sbr.rel (%p174) target = $region28
      $region27: #{tpu_custom_call.1} parent=5 // pred_region
        %s178 = ssub.s32 %s17, 1
        %s179 = sand.u32 %s44, 1
        %s180 = scalar_lea.sflag [#allocation3], %s179
        %s181 = sand.u32 %s44, 1
        %s182 = smul.addr %s181, 4
        %s183 = scalar_lea.vmem [#allocation2], %s182
        // Predicated region
        $region29: #{tpu_custom_call.1} parent=27 // pred_check
          %p184 = pneg %p57
        $region30: #{tpu_custom_call.1} parent=27 // pred_check_branch
          %186 = sbr.rel (%p184) target = $region32
        $region31: #{tpu_custom_call.1} parent=27 // pred_region
          %187 = dma.done %s180, 64
        $region32: #{tpu_custom_call.1} parent=27 // pred_fallthru
          _
        %s188 = sand.u32 %s72, 1
        %s189 = scalar_lea.sflag [#allocation6], %s188
        %s190 = sand.u32 %s72, 1
        %s191 = smul.addr %s190, 12
        %s192 = scalar_lea.vmem [#allocation5], %s191
        // Predicated region
        $region33: #{tpu_custom_call.1} parent=27 // pred_check
          %p193 = pneg %p85
        $region34: #{tpu_custom_call.1} parent=27 // pred_check_branch
          %195 = sbr.rel (%p193) target = $region36
        $region35: #{tpu_custom_call.1} parent=27 // pred_region
          %196 = dma.done %s189, 192
        $region36: #{tpu_custom_call.1} parent=27 // pred_fallthru
          _
        %s197 = sand.u32 %s44, 1
        %s198 = scalar_lea.sflag [#allocation3], %s197
        %s199 = sand.u32 %s44, 1
        %s200 = smul.addr %s199, 4
        %s201 = scalar_lea.vmem [#allocation2], %s200
        %p202 = pneg %p57
        %p203 = pneg %p54
        %s204 = sand.u32 %s72, 1
        %s205 = scalar_lea.sflag [#allocation6], %s204
        %s206 = sand.u32 %s72, 1
        %s207 = smul.addr %s206, 12
        %s208 = scalar_lea.vmem [#allocation5], %s207
        %p209 = pneg %p85
        %p210 = pneg %p82
        %p211 = pneg %p111
        %p212 = pneg %p108
        %s213 = sand.u32 %s98, 1
        %s214 = scalar_lea.sflag [#allocation4], %s213
        %s215 = sand.u32 %s98, 1
        %s216 = smul.addr %s215, 10
        %s217 = scalar_lea.vmem [#allocation7], %s216
        %s218 = sadd.s32 %s26, %s27
        %s219 = smul.u32 2, %s218
        %s220 = sadd.s32 %s26, %s27
        %s221 = smul.u32 2, %s220
        %v222 = vld [vmem:[%s183] sm:$0xf]
        %v223 = vld [vmem:[%s192] sm:$0xf]
        %v224 = vmul.f32 %v223, 0.2989
        %s225 = scalar_lea.vmem %s192, 4 [#allocation5]
        %v226 = vld [vmem:[%s225] sm:$0xf]
        %v227 = vmul.f32 %v226, 0.587
        %v228 = vadd.f32 %v224, %v227
        %s229 = scalar_lea.vmem %s192, 8 [#allocation5]
        %v230 = vld [vmem:[%s229] sm:$0xf]
        %v231 = vmul.f32 %v230, 0.114
        %v232 = vadd.f32 %v228, %v231
        %v234 = vrot.slane %v222, 2
        %v236 = vadd.f32 %v222, %v234
        %v237 = vmul.f32 %v222, %v222
        %v239 = vrot.slane %v237, 2
        %v241 = vadd.f32 %v237, %v239
        %v243 = vrot.slane %v232, 2
        %v245 = vadd.f32 %v232, %v243
        %v246 = vmul.f32 %v232, %v232
        %v248 = vrot.slane %v246, 2
        %v250 = vadd.f32 %v246, %v248
        %v251 = vmul.f32 %v222, %v232
        %v253 = vrot.slane %v251, 2
        %v255 = vadd.f32 %v251, %v253
        %p256 = scmp.eq.s32.totalorder %s27, 0
        // Predicated region
        $region37: #{tpu_custom_call.1} parent=27 // pred_check
          %p257 = pneg %p256
        $region38: #{tpu_custom_call.1} parent=27 // pred_check_branch
          %259 = sbr.rel (%p257) target = $region40
        $region39: #{tpu_custom_call.1} parent=27 // pred_region
          %260 = vst [vmem:[%s217] sm:$0x3] %v236
          %s261 = scalar_lea.vmem %s217, 2 [#allocation7]
          %262 = vst [vmem:[%s261] sm:$0x3] %v241
          %s263 = scalar_lea.vmem %s217, 4 [#allocation7]
          %264 = vst [vmem:[%s263] sm:$0x3] %v245
          %s265 = scalar_lea.vmem %s217, 6 [#allocation7]
          %266 = vst [vmem:[%s265] sm:$0x3] %v250
          %s267 = scalar_lea.vmem %s217, 8 [#allocation7]
          %268 = vst [vmem:[%s267] sm:$0x3] %v255
        $region40: #{tpu_custom_call.1} parent=27 // pred_fallthru
          _
        %p269 = scmp.ne.s32.totalorder %s27, 0
        // Predicated region
        $region41: #{tpu_custom_call.1} parent=27 // pred_check
          %p270 = pneg %p269
        $region42: #{tpu_custom_call.1} parent=27 // pred_check_branch
          %272 = sbr.rel (%p270) target = $region44
        $region43: #{tpu_custom_call.1} parent=27 // pred_region
          %v273 = vld [vmem:[%s217] sm:$0x3]
          %v274 = vadd.f32 %v273, %v236
          %275 = vst [vmem:[%s217] sm:$0x3] %v274
          %s276 = scalar_lea.vmem %s217, 2 [#allocation7]
          %v277 = vld [vmem:[%s276] sm:$0x3]
          %v278 = vadd.f32 %v277, %v241
          %279 = vst [vmem:[%s276] sm:$0x3] %v278
          %s280 = scalar_lea.vmem %s217, 4 [#allocation7]
          %v281 = vld [vmem:[%s280] sm:$0x3]
          %v282 = vadd.f32 %v281, %v245
          %283 = vst [vmem:[%s280] sm:$0x3] %v282
          %s284 = scalar_lea.vmem %s217, 6 [#allocation7]
          %v285 = vld [vmem:[%s284] sm:$0x3]
          %v286 = vadd.f32 %v285, %v250
          %287 = vst [vmem:[%s284] sm:$0x3] %v286
          %s288 = scalar_lea.vmem %s217, 8 [#allocation7]
          %v289 = vld [vmem:[%s288] sm:$0x3]
          %v290 = vadd.f32 %v289, %v255
          %291 = vst [vmem:[%s288] sm:$0x3] %v290
        $region44: #{tpu_custom_call.1} parent=27 // pred_fallthru
          _
        %s292 = sand.u32 %s98, 1
        %s293 = scalar_lea.sflag [#allocation4], %s292
        %s294 = sand.u32 %s98, 1
        %s295 = smul.addr %s294, 10
        %s296 = scalar_lea.vmem [#allocation7], %s295
        // Predicated region
        $region45: #{tpu_custom_call.1} parent=27 // pred_check
          %p297 = pneg %p108
        $region46: #{tpu_custom_call.1} parent=27 // pred_check_branch
          %299 = sbr.rel (%p297) target = $region48
        $region47: #{tpu_custom_call.1} parent=27 // pred_region
          %s301 = ssub.s32 160, 160
          %302 = vsyncadd %s293, %s301
          %s303 = smul.addr %s26, 5
          %s304 = smul.addr %s303, 32
          %s305 = scalar_lea.hbm %s2, %s304
          %s306 = sshll.u32 %s296, 4
          %s307 = int_to_ptr.vmem [resolvable:$true] %s306
          %312 = dma.vmem_to_hbm [thread:$0]  %s307, 160, %s305, %s293, 32, 32, 2
        $region48: #{tpu_custom_call.1} parent=27 // pred_fallthru
          _
      $region28: #{tpu_custom_call.1} parent=5 // pred_fallthru
        _
      %p313 = scmp.le.s32.totalorder 2, %s17
      // Predicated region
      $region49: #{tpu_custom_call.1} parent=5 // pred_check
        %p314 = pneg %p313
      $region50: #{tpu_custom_call.1} parent=5 // pred_check_branch
        %316 = sbr.rel (%p314) target = $region52
      $region51: #{tpu_custom_call.1} parent=5 // pred_region
        %s317 = ssub.s32 %s17, 2
        // Predicated region
        $region53: #{tpu_custom_call.1} parent=51 // pred_check
          %p318 = pneg %p114
        $region54: #{tpu_custom_call.1} parent=51 // pred_check_branch
          %320 = sbr.rel (%p318) target = $region56
        $region55: #{tpu_custom_call.1} parent=51 // pred_region
          %s321 = sand.u32 %s99, 1
          %s322 = scalar_lea.sflag [#allocation4], %s321
          %s323 = sand.u32 %s99, 1
          %s324 = smul.addr %s323, 10
          %s325 = scalar_lea.vmem [#allocation7], %s324
          %326 = dma.done %s322, 160
        $region56: #{tpu_custom_call.1} parent=51 // pred_fallthru
          _
      $region52: #{tpu_custom_call.1} parent=5 // pred_fallthru
        _
    $region6: #{tpu_custom_call.1} parent=1 // loop_footer
      %s21 = sadd.s32 1, %s17
    $region7: #{tpu_custom_call.1} parent=1 // loop_footer_branch
      %16 = sbr.rel target = $region3
    $region8: #{tpu_custom_call.1} parent=1 // loop_exit
      _
    %327 = vsyncpa [#allocation3], 1
    %s328 = scalar_lea.sflag [#allocation3], 1
    %329 = vsyncpa %s328, 1
    %330 = vsyncpa [#allocation6], 1
    %s331 = scalar_lea.sflag [#allocation6], 1
    %332 = vsyncpa %s331, 1
    %333 = vsyncpa [#allocation4], 1
    %s334 = scalar_lea.sflag [#allocation4], 1
    %335 = vsyncpa %s334, 1

</llo_original>
